<compile_context>
chip_gen: v5e
topology: v5e:2x2
jax: 0.10.0
libtpu: 0.0.40
codegen_flags: <defaults>
</compile_context>

<pallas_src>
import jax
import jax.numpy as jnp
from jax import lax
from jax.experimental import pallas as pl
from jax.experimental.pallas import tpu as pltpu

LANE = 128      # lane width / MXU-friendly padding target
SUBLANE = 8     # f32 sublane height

# NOTE: on v6e/v7x you can set this to jnp.bfloat16 (operands only; accumulation
# stays f32 via preferred_element_type) to halve weight DMA bytes. Kept f32 here
# for v5e compatibility and tight numerical tolerance.
MXU_DTYPE = jnp.float32


def _round_up(x, m):
    return ((x + m - 1) // m) * m


def _mlp_kernel(scales_ref, x_ref, v1_ref, b1_ref, v2_ref, b2_ref, o_ref):
    """Fused weight-norm MLP: o = s2*(relu(s1*(x·V1ᵀ) + b1)·V2ᵀ) + b2.

    scales_ref : SMEM (2,) f32  -> [g1/||V1||_F, g2/||V2||_F]
    x_ref      : (TB, in_p)     batch tile
    v1_ref     : (hid_p, in_p)  PyTorch [out, in] layout, zero-padded
    b1_ref     : (1, hid_p)
    v2_ref     : (out_p, hid_p)
    b2_ref     : (1, out_p)
    o_ref      : (TB, out_p)
    """
    s1 = scales_ref[0]
    s2 = scales_ref[1]

    # hidden = relu(s1 * (x · V1ᵀ) + b1)   -- contract trailing dims, no transpose
    h = lax.dot_general(
        x_ref[...].astype(MXU_DTYPE), v1_ref[...].astype(MXU_DTYPE),
        dimension_numbers=(((1,), (1,)), ((), ())),
        preferred_element_type=jnp.float32)
    h = jnp.maximum(h * s1 + b1_ref[...], 0.0)

    # dropout (eval mode) == identity

    # logits = s2 * (h · V2ᵀ) + b2
    out = lax.dot_general(
        h.astype(MXU_DTYPE), v2_ref[...].astype(MXU_DTYPE),
        dimension_numbers=(((1,), (1,)), ((), ())),
        preferred_element_type=jnp.float32)
    o_ref[...] = (out * s2 + b2_ref[...]).astype(o_ref.dtype)


def prepare_params(params):
    """One-time parameter prep (done once, not per forward call).

    Computes the weight-norm scalars and zero-pads all weight/bias lane dims
    to multiples of 128 while keeping the PyTorch [out, in] layout.
    """
    v1, v2 = params["v1"], params["v2"]
    hid_dim, in_dim = v1.shape
    out_dim, _ = v2.shape

    in_p = _round_up(in_dim, LANE)
    hid_p = _round_up(hid_dim, LANE)
    out_p = _round_up(out_dim, LANE)

    s1 = (params["g1"] / jnp.linalg.norm(v1)).astype(jnp.float32)
    s2 = (params["g2"] / jnp.linalg.norm(v2)).astype(jnp.float32)
    scales = jnp.stack([s1, s2])                                      # (2,) f32 -> SMEM

    v1_p = jnp.pad(v1, ((0, hid_p - hid_dim), (0, in_p - in_dim))).astype(MXU_DTYPE)
    v2_p = jnp.pad(v2, ((0, out_p - out_dim), (0, hid_p - hid_dim))).astype(MXU_DTYPE)
    b1_p = jnp.pad(params["b1"], (0, hid_p - hid_dim)).reshape(1, hid_p)
    b2_p = jnp.pad(params["b2"], (0, out_p - out_dim)).reshape(1, out_p)

    return {
        "scales": scales,
        "v1": v1_p, "b1": b1_p,
        "v2": v2_p, "b2": b2_p,
        "in_dim": in_dim, "out_dim": out_dim,
    }


def simple_classifier_forward(x, prepared, *, batch_tile=128):
    """x: [B, in_dim] float32.  prepared: output of prepare_params()."""
    B, in_dim = x.shape
    hid_p, in_p = prepared["v1"].shape
    out_p = prepared["v2"].shape[0]
    out_dim = prepared["out_dim"]

    # Batch tile: multiple of 8 sublanes, capped at batch_tile.
    TB = min(batch_tile, _round_up(B, SUBLANE))
    B_pad = _round_up(B, TB)

    # Per-call padding touches only the small activation tensor.
    x_p = jnp.pad(x, ((0, B_pad - B), (0, in_p - in_dim)))

    grid = (B_pad // TB,)

    out_padded = pl.pallas_call(
        _mlp_kernel,
        out_shape=jax.ShapeDtypeStruct((B_pad, out_p), x.dtype),
        grid_spec=pltpu.PrefetchScalarGridSpec(
            num_scalar_prefetch=0,
            grid=grid,
            in_specs=[
                # weight-norm scalars live in SMEM
                pl.BlockSpec(memory_space=pltpu.MemorySpace.SMEM),
                # x streams per batch tile
                pl.BlockSpec((TB, in_p), lambda i: (i, 0)),
                # weights / biases stay resident (constant index_map)
                pl.BlockSpec((hid_p, in_p), lambda i: (0, 0)),
                pl.BlockSpec((1, hid_p), lambda i: (0, 0)),
                pl.BlockSpec((out_p, hid_p), lambda i: (0, 0)),
                pl.BlockSpec((1, out_p), lambda i: (0, 0)),
            ],
            out_specs=pl.BlockSpec((TB, out_p), lambda i: (i, 0)),
        ),
        compiler_params=pltpu.CompilerParams(
            dimension_semantics=("parallel",),   # lets v7x shard batch tiles over 2 TCs
        ),
    )(prepared["scales"], x_p, prepared["v1"], prepared["b1"],
      prepared["v2"], prepared["b2"])

    return out_padded[:B, :out_dim]


def _reference(x, params):
    w1 = params["g1"] * params["v1"] / jnp.linalg.norm(params["v1"])
    w2 = params["g2"] * params["v2"] / jnp.linalg.norm(params["v2"])
    h = jnp.maximum(x @ w1.T + params["b1"], 0.0)
    return h @ w2.T + params["b2"]


if __name__ == "__main__":
    # B=24 so the batch grid actually has 3 steps (TB=8) at these toy shapes.
    B, in_dim, hid_dim, out_dim = 24, 32, 64, 16

    key = jax.random.PRNGKey(0)
    k = jax.random.split(key, 7)
    x = jax.random.normal(k[0], (B, in_dim), dtype=jnp.float32)

    # Deterministic synthetic parameters (PyTorch Linear layout: [out, in]).
    params = {
        "v1": jax.random.normal(k[1], (hid_dim, in_dim), jnp.float32) * 0.1,
        "g1": jnp.float32(1.5),
        "b1": jax.random.normal(k[2], (hid_dim,), jnp.float32) * 0.05,
        "v2": jax.random.normal(k[3], (out_dim, hid_dim), jnp.float32) * 0.1,
        "g2": jnp.float32(0.8),
        "b2": jax.random.normal(k[4], (out_dim,), jnp.float32) * 0.05,
    }

    prepared = prepare_params(params)          # one-time prep (pad + scalars)
    logits = simple_classifier_forward(x, prepared, batch_tile=8)
    logits = jax.block_until_ready(logits)

    ref = _reference(x, params)
    assert logits.shape == (B, out_dim)
    assert jnp.allclose(logits, ref, atol=1e-4, rtol=1e-4)

    print("KERNEL_OK")
</pallas_src>

<mosaic_0001>
module attributes {stable_mosaic.version = 11 : i64} {
  func.func @_mlp_kernel(%arg0: i32, %arg1: memref<2xf32, #tpu.memory_space<smem>>, %arg2: memref<8x128xf32, #tpu.memory_space<vmem>>, %arg3: memref<128x128xf32, #tpu.memory_space<vmem>>, %arg4: memref<1x128xf32, #tpu.memory_space<vmem>>, %arg5: memref<128x128xf32, #tpu.memory_space<vmem>>, %arg6: memref<1x128xf32, #tpu.memory_space<vmem>>, %arg7: memref<8x128xf32, #tpu.memory_space<vmem>>) attributes {dimension_semantics = [#tpu.dimension_semantics<parallel>], iteration_bounds = array<i64: 3>, scalar_prefetch = 0 : i64, scratch_operands = 0 : i64, tpu.core_type = #tpu.core_type<tc>, window_params = [{transform_indices = @transform_0, window_bounds = array<i64: 2>}, {transform_indices = @transform_1, window_bounds = array<i64: 8, 128>}, {pipeline_mode = #tpu.pipeline_mode<synchronous>, transform_indices = @transform_2, window_bounds = array<i64: 128, 128>}, {pipeline_mode = #tpu.pipeline_mode<synchronous>, transform_indices = @transform_3, window_bounds = array<i64: 1, 128>}, {pipeline_mode = #tpu.pipeline_mode<synchronous>, transform_indices = @transform_4, window_bounds = array<i64: 128, 128>}, {pipeline_mode = #tpu.pipeline_mode<synchronous>, transform_indices = @transform_5, window_bounds = array<i64: 1, 128>}, {transform_indices = @transform_6, window_bounds = array<i64: 8, 128>}]} {
    %c0 = arith.constant 0 : index
    %0 = memref.load %arg1[%c0] : memref<2xf32, #tpu.memory_space<smem>>
    %c1 = arith.constant 1 : index
    %1 = memref.load %arg1[%c1] : memref<2xf32, #tpu.memory_space<smem>>
    %c0_0 = arith.constant 0 : index
    %c0_1 = arith.constant 0 : index
    %2 = vector.load %arg2[%c0_0, %c0_1] : memref<8x128xf32, #tpu.memory_space<vmem>>, vector<8x128xf32>
    %c0_2 = arith.constant 0 : index
    %c0_3 = arith.constant 0 : index
    %3 = vector.load %arg3[%c0_2, %c0_3] : memref<128x128xf32, #tpu.memory_space<vmem>>, vector<128x128xf32>
    %cst = arith.constant dense<0.000000e+00> : vector<8x128xf32>
    %4 = tpu.matmul %2, %3, %cst {dimension_numbers = #tpu.dot_dimension_numbers<[1], [1], [0], [0], [0, 0, 1, 0], [], []>} : vector<8x128xf32>, vector<128x128xf32>, vector<8x128xf32> -> vector<8x128xf32>
    %5 = vector.broadcast %0 : f32 to vector<8x128xf32>
    %6 = arith.mulf %4, %5 : vector<8x128xf32>
    %c0_4 = arith.constant 0 : index
    %c0_5 = arith.constant 0 : index
    %7 = vector.load %arg4[%c0_4, %c0_5] : memref<1x128xf32, #tpu.memory_space<vmem>>, vector<1x128xf32>
    %8 = vector.broadcast %7 : vector<1x128xf32> to vector<8x128xf32>
    %9 = arith.addf %6, %8 : vector<8x128xf32>
    %cst_6 = arith.constant 0.000000e+00 : f32
    %10 = vector.broadcast %cst_6 : f32 to vector<8x128xf32>
    %11 = arith.maximumf %9, %10 : vector<8x128xf32>
    %c0_7 = arith.constant 0 : index
    %c0_8 = arith.constant 0 : index
    %12 = vector.load %arg5[%c0_7, %c0_8] : memref<128x128xf32, #tpu.memory_space<vmem>>, vector<128x128xf32>
    %cst_9 = arith.constant dense<0.000000e+00> : vector<8x128xf32>
    %13 = tpu.matmul %11, %12, %cst_9 {dimension_numbers = #tpu.dot_dimension_numbers<[1], [1], [0], [0], [0, 0, 1, 0], [], []>} : vector<8x128xf32>, vector<128x128xf32>, vector<8x128xf32> -> vector<8x128xf32>
    %14 = vector.broadcast %1 : f32 to vector<8x128xf32>
    %15 = arith.mulf %13, %14 : vector<8x128xf32>
    %c0_10 = arith.constant 0 : index
    %c0_11 = arith.constant 0 : index
    %16 = vector.load %arg6[%c0_10, %c0_11] : memref<1x128xf32, #tpu.memory_space<vmem>>, vector<1x128xf32>
    %17 = vector.broadcast %16 : vector<1x128xf32> to vector<8x128xf32>
    %18 = arith.addf %15, %17 : vector<8x128xf32>
    %c0_12 = arith.constant 0 : index
    %c0_13 = arith.constant 0 : index
    %19 = vector.load %arg7[%c0_12, %c0_13] : memref<8x128xf32, #tpu.memory_space<vmem>>, vector<8x128xf32>
    tpu.vector_store %arg7[%c0_12, %c0_13], %18 {strides = array<i32>} : memref<8x128xf32, #tpu.memory_space<vmem>>, vector<8x128xf32>,
    return
  }
  func.func @transform_0(%arg0: i32) -> i32 {
    %c0_i32 = arith.constant 0 : i32
    %c0_i32_0 = arith.constant 0 : i32
    return %c0_i32 : i32
  }
  func.func @transform_1(%arg0: i32) -> (i32, i32) {
    %c0_i32 = arith.constant 0 : i32
    %c0_i32_0 = arith.constant 0 : i32
    return %arg0, %c0_i32 : i32, i32
  }
  func.func @transform_2(%arg0: i32) -> (i32, i32) {
    %c0_i32 = arith.constant 0 : i32
    %c0_i32_0 = arith.constant 0 : i32
    %c0_i32_1 = arith.constant 0 : i32
    return %c0_i32, %c0_i32_0 : i32, i32
  }
  func.func @transform_3(%arg0: i32) -> (i32, i32) {
    %c0_i32 = arith.constant 0 : i32
    %c0_i32_0 = arith.constant 0 : i32
    %c0_i32_1 = arith.constant 0 : i32
    return %c0_i32, %c0_i32_0 : i32, i32
  }
  func.func @transform_4(%arg0: i32) -> (i32, i32) {
    %c0_i32 = arith.constant 0 : i32
    %c0_i32_0 = arith.constant 0 : i32
    %c0_i32_1 = arith.constant 0 : i32
    return %c0_i32, %c0_i32_0 : i32, i32
  }
  func.func @transform_5(%arg0: i32) -> (i32, i32) {
    %c0_i32 = arith.constant 0 : i32
    %c0_i32_0 = arith.constant 0 : i32
    %c0_i32_1 = arith.constant 0 : i32
    return %c0_i32, %c0_i32_0 : i32, i32
  }
  func.func @transform_6(%arg0: i32) -> (i32, i32) {
    %c0_i32 = arith.constant 0 : i32
    %c0_i32_0 = arith.constant 0 : i32
    return %arg0, %c0_i32 : i32, i32
  }
}

</mosaic_0001>

<llo_original>
// kernel: tpu_custom_call.1
$region0: #{tpu_custom_call.1}
  #allocation0 [shape = 'u32[]', space=smem, size = 0x4, offset = 0x4, fixed_abs, tag = 'smem constant byte address 0x4 - core index']
  #allocation1 [shape = 'u32[72,128]{1,0:T(1,128)}', space=vmem, size = 0x9000, scoped, tag = 'internal scratch']
  %s0 = inlined_call_operand.hbm [shape: f32[2], index: 0, kind: input, shape index: {}]
  %s1 = inlined_call_operand.hbm [shape: f32[24,128], index: 1, kind: input, shape index: {}]
  %s2 = inlined_call_operand.hbm [shape: f32[128,128], index: 2, kind: input, shape index: {}]
  %s3 = inlined_call_operand.vmem [shape: f32[1,128], index: 3, kind: input, shape index: {}]
  %s4 = inlined_call_operand.hbm [shape: f32[128,128], index: 4, kind: input, shape index: {}]
  %s5 = inlined_call_operand.vmem [shape: f32[1,128], index: 5, kind: input, shape index: {}]
  %s6 = inlined_call_operand.hbm [shape: f32[24,128], index: 6, kind: output, shape index: {}]
  %s7 = sld [smem:[#allocation0]]
  $region73: #{tpu_custom_call.1} parent=0
    _
  %s9 = ssub.s32 1, %s7
  %s10 = scalar_select 0, %s9, %s7
  $region1: #{tpu_custom_call.1} parent=0
    #allocation2 [shape = 'u8[512]{0}', space=smem, size = 0x200, scoped, tag = 'input window, operand 0, single buffered']
    #allocation3 [shape = 's32[2]{0}', space=sflag, size = 0x8, scoped, tag = 'scoped memory for tpu_custom_call.1']
    #allocation4 [shape = 's32[2]{0}', space=sflag, size = 0x8, scoped, tag = 'scoped memory for tpu_custom_call.1']
    #allocation5 [shape = 's32[2]{0}', space=sflag, size = 0x8, scoped, tag = 'scoped memory for tpu_custom_call.1']
    #allocation6 [shape = 'u8[8192]{0}', space=vmem, size = 0x2000, scoped, tag = 'input window, operand 1']
    #allocation7 [shape = 'u8[65536]{0}', space=vmem, size = 0x10000, scoped, tag = 'input window, operand 2, single buffered']
    #allocation8 [shape = 's32[1]{0}', space=sflag, size = 0x4, scoped, tag = 'scoped memory for tpu_custom_call.1']
    #allocation9 [shape = 'u8[65536]{0}', space=vmem, size = 0x10000, scoped, tag = 'input window, operand 4, single buffered']
    #allocation10 [shape = 'u8[8192]{0}', space=vmem, size = 0x2000, scoped, tag = 'output window, operand 0']
    %11 = vsyncpa [#allocation5], 0
    %12 = vsyncpa [#allocation3], 0
    %s13 = scalar_lea.sflag [#allocation3], 1
    %14 = vsyncpa %s13, 0
    %15 = vsyncpa [#allocation8], 0
    %16 = vsyncpa [#allocation4], 0
    %s17 = scalar_lea.sflag [#allocation4], 1
    %18 = vsyncpa %s17, 0
    loop: start=0, step=1, limit=5
    $region2: #{tpu_custom_call.1} parent=1 // loop_pre_header
      _
    $region3: #{tpu_custom_call.1} parent=1 // loop_header
      %s20 = sphi 0, %s24
      %p21 = scmp.ge.s32.totalorder %s20, 5
      %s28 = sphi 0, %s28
      %s30 = sphi 0, %s28
      %s31 = sphi 0, %s30
      %s45 = sphi 0, %s31
      %s51 = sphi 0, %s53
      %s54 = sphi 0, %s51
      %s55 = sphi 0, %s54
      %s71 = sphi 0, %s55
      %s75 = sphi 0, %s75
      %s77 = sphi 0, %s75
      %s78 = sphi 0, %s77
      %s92 = sphi 0, %s78
      %s96 = sphi 0, %s96
      %s98 = sphi 0, %s96
      %s99 = sphi 0, %s98
      %s113 = sphi 0, %s99
      %s117 = sphi 0, %s117
      %s119 = sphi 0, %s117
      %s120 = sphi 0, %s119
      %s134 = sphi 0, %s120
      %s138 = sphi 0, %s138
      %s140 = sphi 0, %s138
      %s141 = sphi 0, %s140
      %s155 = sphi 0, %s141
      %s161 = sphi 0, %s163
      %s164 = sphi 0, %s161
      %s165 = sphi 0, %s164
      %s181 = sphi 0, %s165
    $region4: #{tpu_custom_call.1} parent=1 // loop_header_branch
      %23 = sbr.rel (%p21) target = $region8
    $region5: #{tpu_custom_call.1} parent=1 // loop_body
      %s25 = ssub.s32 %s20, 1
      %s26 = ssub.s32 %s20, 2
      %s27 = sadd.s32 %s20, 1
      %s29 = sadd.s32 %s28, 1
      %p32 = scmp.eq.s32.totalorder %s20, 2
      %p33 = scmp.ne.s32.totalorder %s28, %s30
      %p34 = scmp.eq.s32.totalorder %s20, 0
      %p35 = por %p33, %p34
      %p36 = scmp.ne.s32.totalorder %s28, %s30
      %p37 = scmp.eq.s32.totalorder %s25, 2
      %p38 = por %p36, %p37
      %p39 = scmp.ne.s32.totalorder %s30, %s31
      %p40 = scmp.eq.s32.totalorder %s25, 0
      %p41 = por %p39, %p40
      %p42 = scmp.ne.s32.totalorder %s30, %s31
      %p43 = scmp.eq.s32.totalorder %s26, 2
      %p44 = por %p42, %p43
      %p46 = scmp.ne.s32.totalorder %s31, %s45
      %p47 = scmp.eq.s32.totalorder %s26, 0
      %p48 = por %p46, %p47
      %s49 = ssub.s32 %s20, %s27
      %p50 = scmp.eq.s32.totalorder %s49, 0
      %s52 = sadd.s32 %s51, 1
      %s53 = scalar_select %p50, %s51, %s52
      %p56 = pneg %p50
      %p57 = scmp.eq.s32.totalorder %s20, 2
      %p58 = por %p56, %p57
      %p59 = scmp.ne.s32.totalorder %s51, %s54
      %p60 = scmp.eq.s32.totalorder %s20, 0
      %p61 = por %p59, %p60
      %p62 = scmp.ne.s32.totalorder %s51, %s54
      %p63 = scmp.eq.s32.totalorder %s25, 2
      %p64 = por %p62, %p63
      %p65 = scmp.ne.s32.totalorder %s54, %s55
      %p66 = scmp.eq.s32.totalorder %s25, 0
      %p67 = por %p65, %p66
      %p68 = scmp.ne.s32.totalorder %s54, %s55
      %p69 = scmp.eq.s32.totalorder %s26, 2
      %p70 = por %p68, %p69
      %p72 = scmp.ne.s32.totalorder %s55, %s71
      %p73 = scmp.eq.s32.totalorder %s26, 0
      %p74 = por %p72, %p73
      %s76 = sadd.s32 %s75, 1
      %p79 = scmp.eq.s32.totalorder %s20, 2
      %p80 = scmp.ne.s32.totalorder %s75, %s77
      %p81 = scmp.eq.s32.totalorder %s20, 0
      %p82 = por %p80, %p81
      %p83 = scmp.ne.s32.totalorder %s75, %s77
      %p84 = scmp.eq.s32.totalorder %s25, 2
      %p85 = por %p83, %p84
      %p86 = scmp.ne.s32.totalorder %s77, %s78
      %p87 = scmp.eq.s32.totalorder %s25, 0
      %p88 = por %p86, %p87
      %p89 = scmp.ne.s32.totalorder %s77, %s78
      %p90 = scmp.eq.s32.totalorder %s26, 2
      %p91 = por %p89, %p90
      %p93 = scmp.ne.s32.totalorder %s78, %s92
      %p94 = scmp.eq.s32.totalorder %s26, 0
      %p95 = por %p93, %p94
      %s97 = sadd.s32 %s96, 1
      %p100 = scmp.eq.s32.totalorder %s20, 2
      %p101 = scmp.ne.s32.totalorder %s96, %s98
      %p102 = scmp.eq.s32.totalorder %s20, 0
      %p103 = por %p101, %p102
      %p104 = scmp.ne.s32.totalorder %s96, %s98
      %p105 = scmp.eq.s32.totalorder %s25, 2
      %p106 = por %p104, %p105
      %p107 = scmp.ne.s32.totalorder %s98, %s99
      %p108 = scmp.eq.s32.totalorder %s25, 0
      %p109 = por %p107, %p108
      %p110 = scmp.ne.s32.totalorder %s98, %s99
      %p111 = scmp.eq.s32.totalorder %s26, 2
      %p112 = por %p110, %p111
      %p114 = scmp.ne.s32.totalorder %s99, %s113
      %p115 = scmp.eq.s32.totalorder %s26, 0
      %p116 = por %p114, %p115
      %s118 = sadd.s32 %s117, 1
      %p121 = scmp.eq.s32.totalorder %s20, 2
      %p122 = scmp.ne.s32.totalorder %s117, %s119
      %p123 = scmp.eq.s32.totalorder %s20, 0
      %p124 = por %p122, %p123
      %p125 = scmp.ne.s32.totalorder %s117, %s119
      %p126 = scmp.eq.s32.totalorder %s25, 2
      %p127 = por %p125, %p126
      %p128 = scmp.ne.s32.totalorder %s119, %s120
      %p129 = scmp.eq.s32.totalorder %s25, 0
      %p130 = por %p128, %p129
      %p131 = scmp.ne.s32.totalorder %s119, %s120
      %p132 = scmp.eq.s32.totalorder %s26, 2
      %p133 = por %p131, %p132
      %p135 = scmp.ne.s32.totalorder %s120, %s134
      %p136 = scmp.eq.s32.totalorder %s26, 0
      %p137 = por %p135, %p136
      %s139 = sadd.s32 %s138, 1
      %p142 = scmp.eq.s32.totalorder %s20, 2
      %p143 = scmp.ne.s32.totalorder %s138, %s140
      %p144 = scmp.eq.s32.totalorder %s20, 0
      %p145 = por %p143, %p144
      %p146 = scmp.ne.s32.totalorder %s138, %s140
      %p147 = scmp.eq.s32.totalorder %s25, 2
      %p148 = por %p146, %p147
      %p149 = scmp.ne.s32.totalorder %s140, %s141
      %p150 = scmp.eq.s32.totalorder %s25, 0
      %p151 = por %p149, %p150
      %p152 = scmp.ne.s32.totalorder %s140, %s141
      %p153 = scmp.eq.s32.totalorder %s26, 2
      %p154 = por %p152, %p153
      %p156 = scmp.ne.s32.totalorder %s141, %s155
      %p157 = scmp.eq.s32.totalorder %s26, 0
      %p158 = por %p156, %p157
      %s159 = ssub.s32 %s20, %s27
      %p160 = scmp.eq.s32.totalorder %s159, 0
      %s162 = sadd.s32 %s161, 1
      %s163 = scalar_select %p160, %s161, %s162
      %p166 = pneg %p160
      %p167 = scmp.eq.s32.totalorder %s20, 2
      %p168 = por %p166, %p167
      %p169 = scmp.ne.s32.totalorder %s161, %s164
      %p170 = scmp.eq.s32.totalorder %s20, 0
      %p171 = por %p169, %p170
      %p172 = scmp.ne.s32.totalorder %s161, %s164
      %p173 = scmp.eq.s32.totalorder %s25, 2
      %p174 = por %p172, %p173
      %p175 = scmp.ne.s32.totalorder %s164, %s165
      %p176 = scmp.eq.s32.totalorder %s25, 0
      %p177 = por %p175, %p176
      %p178 = scmp.ne.s32.totalorder %s164, %s165
      %p179 = scmp.eq.s32.totalorder %s26, 2
      %p180 = por %p178, %p179
      %p182 = scmp.ne.s32.totalorder %s165, %s181
      %p183 = scmp.eq.s32.totalorder %s26, 0
      %p184 = por %p182, %p183
      %p185 = scmp.le.s32.totalorder 1, %s20
      %p186 = scmp.lt.s32.totalorder %s20, 4
      %p187 = pnand %p185, %p186
      %p188 = pneg %p187
      // Predicated region
      $region9: #{tpu_custom_call.1} parent=5 // pred_check
        _
      $region10: #{tpu_custom_call.1} parent=5 // pred_check_branch
        %190 = sbr.rel (%p187) target = $region12
      $region11: #{tpu_custom_call.1} parent=5 // pred_region
        %s191 = ssub.s32 %s20, 1
        // Predicated region
        $region13: #{tpu_custom_call.1} parent=11 // pred_check
          %p192 = pneg %p41
        $region14: #{tpu_custom_call.1} parent=11 // pred_check_branch
          %194 = sbr.rel (%p192) target = $region16
        $region15: #{tpu_custom_call.1} parent=11 // pred_region
          %196 = vsyncadd [#allocation5], 0
          %s198 = sshll.u32 %s0, 4
          %s199 = int_to_ptr.hbm [resolvable:$true] %s198
          %201 = dma.hbm_to_smem %s199, 16, [#allocation2], [#allocation5]
        $region16: #{tpu_custom_call.1} parent=11 // pred_fallthru
          _
        // Predicated region
        $region17: #{tpu_custom_call.1} parent=11 // pred_check
          %p202 = pneg %p88
        $region18: #{tpu_custom_call.1} parent=11 // pred_check_branch
          %204 = sbr.rel (%p202) target = $region20
        $region19: #{tpu_custom_call.1} parent=11 // pred_region
          %206 = vsyncadd [#allocation8], 0
          %s207 = sshll.u32 %s2, 4
          %s208 = int_to_ptr.hbm [resolvable:$true] %s207
          %s209 = sshll.u32 [#allocation7], 4
          %s210 = int_to_ptr.vmem [resolvable:$true] %s209
          %215 = dma.hbm_to_vmem [thread:$0]  %s208, 2048, %s210, [#allocation8], 128, 128, 8
        $region20: #{tpu_custom_call.1} parent=11 // pred_fallthru
          _
        // Predicated region
        $region21: #{tpu_custom_call.1} parent=11 // pred_check
          %p216 = pneg %p109
        $region22: #{tpu_custom_call.1} parent=11 // pred_check_branch
          %218 = sbr.rel (%p216) target = $region24
        $region23: #{tpu_custom_call.1} parent=11 // pred_region
          _
        $region24: #{tpu_custom_call.1} parent=11 // pred_fallthru
          _
        // Predicated region
        $region25: #{tpu_custom_call.1} parent=11 // pred_check
          %p219 = pneg %p130
        $region26: #{tpu_custom_call.1} parent=11 // pred_check_branch
          %221 = sbr.rel (%p219) target = $region28
        $region27: #{tpu_custom_call.1} parent=11 // pred_region
          %223 = vsyncadd [#allocation8], 0
          %s224 = sshll.u32 %s4, 4
          %s225 = int_to_ptr.hbm [resolvable:$true] %s224
          %s226 = sshll.u32 [#allocation9], 4
          %s227 = int_to_ptr.vmem [resolvable:$true] %s226
          %232 = dma.hbm_to_vmem [thread:$0]  %s225, 2048, %s227, [#allocation8], 128, 128, 8
        $region28: #{tpu_custom_call.1} parent=11 // pred_fallthru
          _
        // Predicated region
        $region29: #{tpu_custom_call.1} parent=11 // pred_check
          %p233 = pneg %p151
        $region30: #{tpu_custom_call.1} parent=11 // pred_check_branch
          %235 = sbr.rel (%p233) target = $region32
        $region31: #{tpu_custom_call.1} parent=11 // pred_region
          _
        $region32: #{tpu_custom_call.1} parent=11 // pred_fallthru
          _
      $region12: #{tpu_custom_call.1} parent=5 // pred_fallthru
        _
      %p236 = scmp.lt.s32.totalorder %s20, 3
      // Predicated region
      $region33: #{tpu_custom_call.1} parent=5 // pred_check
        %p237 = pneg %p236
      $region34: #{tpu_custom_call.1} parent=5 // pred_check_branch
        %239 = sbr.rel (%p237) target = $region36
      $region35: #{tpu_custom_call.1} parent=5 // pred_region
        // Predicated region
        $region37: #{tpu_custom_call.1} parent=35 // pred_check
          %p240 = pneg %p61
        $region38: #{tpu_custom_call.1} parent=35 // pred_check_branch
          %242 = sbr.rel (%p240) target = $region40
        $region39: #{tpu_custom_call.1} parent=35 // pred_region
          %s243 = sand.u32 %s51, 1
          %s244 = scalar_lea.sflag [#allocation3], %s243
          %s245 = sand.u32 %s51, 1
          %s246 = smul.addr %s245, 8
          %s247 = scalar_lea.vmem [#allocation6], %s246
          %249 = vsyncadd %s244, 0
          %s250 = smul.addr %s20, 8
          %s251 = scalar_lea.hbm %s1, %s250
          %s253 = sshll.u32 %s251, 4
          %s254 = int_to_ptr.hbm [resolvable:$true] %s253
          %s255 = sshll.u32 %s247, 4
          %s256 = int_to_ptr.vmem [resolvable:$true] %s255
          %258 = dma.hbm_to_vmem [thread:$0]  %s254, 128, %s256, %s244
        $region40: #{tpu_custom_call.1} parent=35 // pred_fallthru
          _
      $region36: #{tpu_custom_call.1} parent=5 // pred_fallthru
        _
      %p259 = scmp.le.s32.totalorder 1, %s20
      %p260 = scmp.lt.s32.totalorder %s20, 4
      %p261 = pnand %p259, %p260
      %p262 = pneg %p261
      // Predicated region
      $region41: #{tpu_custom_call.1} parent=5 // pred_check
        _
      $region42: #{tpu_custom_call.1} parent=5 // pred_check_branch
        %264 = sbr.rel (%p261) target = $region44
      $region43: #{tpu_custom_call.1} parent=5 // pred_region
        %s265 = ssub.s32 %s20, 1
        // Predicated region
        $region45: #{tpu_custom_call.1} parent=43 // pred_check
          %p266 = pneg %p41
        $region46: #{tpu_custom_call.1} parent=43 // pred_check_branch
          %268 = sbr.rel (%p266) target = $region48
        $region47: #{tpu_custom_call.1} parent=43 // pred_region
          %270 = dma.done [#allocation5], 16
        $region48: #{tpu_custom_call.1} parent=43 // pred_fallthru
          _
        %s271 = sand.u32 %s54, 1
        %s272 = scalar_lea.sflag [#allocation3], %s271
        %s273 = sand.u32 %s54, 1
        %s274 = smul.addr %s273, 8
        %s275 = scalar_lea.vmem [#allocation6], %s274
        // Predicated region
        $region49: #{tpu_custom_call.1} parent=43 // pred_check
          %p276 = pneg %p67
        $region50: #{tpu_custom_call.1} parent=43 // pred_check_branch
          %278 = sbr.rel (%p276) target = $region52
        $region51: #{tpu_custom_call.1} parent=43 // pred_region
          %280 = dma.done %s272, 128
        $region52: #{tpu_custom_call.1} parent=43 // pred_fallthru
          _
        // Predicated region
        $region53: #{tpu_custom_call.1} parent=43 // pred_check
          %p281 = pneg %p88
        $region54: #{tpu_custom_call.1} parent=43 // pred_check_branch
          %283 = sbr.rel (%p281) target = $region56
        $region55: #{tpu_custom_call.1} parent=43 // pred_region
          %285 = dma.done [#allocation8], 2048
        $region56: #{tpu_custom_call.1} parent=43 // pred_fallthru
          _
        // Predicated region
        $region57: #{tpu_custom_call.1} parent=43 // pred_check
          %p286 = pneg %p130
        $region58: #{tpu_custom_call.1} parent=43 // pred_check_branch
          %288 = sbr.rel (%p286) target = $region60
        $region59: #{tpu_custom_call.1} parent=43 // pred_region
          %290 = dma.done [#allocation8], 2048
        $region60: #{tpu_custom_call.1} parent=43 // pred_fallthru
          _
        %291 = sfence
        %p292 = pneg %p41
        %p293 = pneg %p38
        %s294 = sand.u32 %s54, 1
        %s295 = scalar_lea.sflag [#allocation3], %s294
        %s296 = sand.u32 %s54, 1
        %s297 = smul.addr %s296, 8
        %s298 = scalar_lea.vmem [#allocation6], %s297
        %p299 = pneg %p67
        %p300 = pneg %p64
        %p301 = pneg %p88
        %p302 = pneg %p85
        %p303 = pneg %p109
        %p304 = pneg %p106
        %p305 = pneg %p130
        %p306 = pneg %p127
        %p307 = pneg %p151
        %p308 = pneg %p148
        %p309 = pneg %p177
        %p310 = pneg %p174
        %s311 = sand.u32 %s164, 1
        %s312 = scalar_lea.sflag [#allocation4], %s311
        %s313 = sand.u32 %s164, 1
        %s314 = smul.addr %s313, 8
        %s315 = scalar_lea.vmem [#allocation10], %s314
        %s316 = sld [smem:[#allocation2]]
        %s317 = sld [smem:[#allocation2 + $0x1]]
        %v318 = vld [vmem:[%s275] sm:$0xff]
        %v319 = vld [vmem:[#allocation7] sm:$0xff]
        %v320 = vld [vmem:[#allocation7 + $0x8] sm:$0xff]
        %v321 = vld [vmem:[#allocation7 + $0x10] sm:$0xff]
        %v322 = vld [vmem:[#allocation7 + $0x18] sm:$0xff]
        %v323 = vld [vmem:[#allocation7 + $0x20] sm:$0xff]
        %v324 = vld [vmem:[#allocation7 + $0x28] sm:$0xff]
        %v325 = vld [vmem:[#allocation7 + $0x30] sm:$0xff]
        %v326 = vld [vmem:[#allocation7 + $0x38] sm:$0xff]
        %v327 = vld [vmem:[#allocation7 + $0x40] sm:$0xff]
        %v328 = vld [vmem:[#allocation7 + $0x48] sm:$0xff]
        %v329 = vld [vmem:[#allocation7 + $0x50] sm:$0xff]
        %v330 = vld [vmem:[#allocation7 + $0x58] sm:$0xff]
        %v331 = vld [vmem:[#allocation7 + $0x60] sm:$0xff]
        %v332 = vld [vmem:[#allocation7 + $0x68] sm:$0xff]
        %v333 = vld [vmem:[#allocation7 + $0x70] sm:$0xff]
        %v334 = vld [vmem:[#allocation7 + $0x78] sm:$0xff]
        %335 = vmatpush.xpose.msra.mxu0 %v334
        %336 = vmatpush.xpose.msra.mxu0 %v333
        %337 = vmatpush.xpose.msra.mxu0 %v332
        %338 = vmatpush.xpose.msra.mxu0 %v331
        %339 = vmatpush.xpose.msra.mxu0 %v330
        %340 = vmatpush.xpose.msra.mxu0 %v329
        %341 = vmatpush.xpose.msra.mxu0 %v328
        %342 = vmatpush.xpose.msra.mxu0 %v327
        %343 = vmatpush.xpose.msra.mxu0 %v326
        %344 = vmatpush.xpose.msra.mxu0 %v325
        %345 = vmatpush.xpose.msra.mxu0 %v324
        %346 = vmatpush.xpose.msra.mxu0 %v323
        %347 = vmatpush.xpose.msra.mxu0 %v322
        %348 = vmatpush.xpose.msra.mxu0 %v321
        %349 = vmatpush.xpose.msra.mxu0 %v320
        %350 = vmatpush.xpose.msra.mxu0 %v319
        %351 = vmatmul.f32.gmra.mxu0 %v318
        %v352 = vpop.f32.mrf.mxu0
        %v353 = vadd.f32 0.0, %v352
        %354 = vdwg.mxu0
        %v355 = vstv %s316
        %v356 = vmul.f32 %v353, %v355
        %v357 = vld [vmem:[%s3] sm:$0x1]
        %v359 = vperm.slane %v357, 0
        %v361 = vadd.f32 %v356, %v359
        %v362 = vmax.f32 %v361, 0.0
        %v363 = vld [vmem:[#allocation9] sm:$0xff]
        %v364 = vld [vmem:[#allocation9 + $0x8] sm:$0xff]
        %v365 = vld [vmem:[#allocation9 + $0x10] sm:$0xff]
        %v366 = vld [vmem:[#allocation9 + $0x18] sm:$0xff]
        %v367 = vld [vmem:[#allocation9 + $0x20] sm:$0xff]
        %v368 = vld [vmem:[#allocation9 + $0x28] sm:$0xff]
        %v369 = vld [vmem:[#allocation9 + $0x30] sm:$0xff]
        %v370 = vld [vmem:[#allocation9 + $0x38] sm:$0xff]
        %v371 = vld [vmem:[#allocation9 + $0x40] sm:$0xff]
        %v372 = vld [vmem:[#allocation9 + $0x48] sm:$0xff]
        %v373 = vld [vmem:[#allocation9 + $0x50] sm:$0xff]
        %v374 = vld [vmem:[#allocation9 + $0x58] sm:$0xff]
        %v375 = vld [vmem:[#allocation9 + $0x60] sm:$0xff]
        %v376 = vld [vmem:[#allocation9 + $0x68] sm:$0xff]
        %v377 = vld [vmem:[#allocation9 + $0x70] sm:$0xff]
        %v378 = vld [vmem:[#allocation9 + $0x78] sm:$0xff]
        %379 = vmatpush.xpose.msra.mxu0 %v378
        %380 = vmatpush.xpose.msra.mxu0 %v377
        %381 = vmatpush.xpose.msra.mxu0 %v376
        %382 = vmatpush.xpose.msra.mxu0 %v375
        %383 = vmatpush.xpose.msra.mxu0 %v374
        %384 = vmatpush.xpose.msra.mxu0 %v373
        %385 = vmatpush.xpose.msra.mxu0 %v372
        %386 = vmatpush.xpose.msra.mxu0 %v371
        %387 = vmatpush.xpose.msra.mxu0 %v370
        %388 = vmatpush.xpose.msra.mxu0 %v369
        %389 = vmatpush.xpose.msra.mxu0 %v368
        %390 = vmatpush.xpose.msra.mxu0 %v367
        %391 = vmatpush.xpose.msra.mxu0 %v366
        %392 = vmatpush.xpose.msra.mxu0 %v365
        %393 = vmatpush.xpose.msra.mxu0 %v364
        %394 = vmatpush.xpose.msra.mxu0 %v363
        %395 = vmatmul.f32.gmra.mxu0 %v362
        %v396 = vpop.f32.mrf.mxu0
        %v397 = vadd.f32 0.0, %v396
        %398 = vdwg.mxu0
        %v399 = vstv %s317
        %v400 = vmul.f32 %v397, %v399
        %v401 = vld [vmem:[%s5] sm:$0x1]
        %v403 = vperm.slane %v401, 0
        %v405 = vadd.f32 %v400, %v403
        %406 = vst [vmem:[%s315] sm:$0xff] %v405
        %s407 = sand.u32 %s164, 1
        %s408 = scalar_lea.sflag [#allocation4], %s407
        %s409 = sand.u32 %s164, 1
        %s410 = smul.addr %s409, 8
        %s411 = scalar_lea.vmem [#allocation10], %s410
        // Predicated region
        $region61: #{tpu_custom_call.1} parent=43 // pred_check
          %p412 = pneg %p174
        $region62: #{tpu_custom_call.1} parent=43 // pred_check_branch
          %414 = sbr.rel (%p412) target = $region64
        $region63: #{tpu_custom_call.1} parent=43 // pred_region
          %416 = vsyncadd %s408, 0
          %s417 = smul.addr %s25, 8
          %s418 = scalar_lea.hbm %s6, %s417
          %s420 = sshll.u32 %s411, 4
          %s421 = int_to_ptr.vmem [resolvable:$true] %s420
          %s422 = sshll.u32 %s418, 4
          %s423 = int_to_ptr.hbm [resolvable:$true] %s422
          %425 = dma.vmem_to_hbm [thread:$0]  %s421, 128, %s423, %s408
        $region64: #{tpu_custom_call.1} parent=43 // pred_fallthru
          _
      $region44: #{tpu_custom_call.1} parent=5 // pred_fallthru
        _
      %p426 = scmp.le.s32.totalorder 2, %s20
      // Predicated region
      $region65: #{tpu_custom_call.1} parent=5 // pred_check
        %p427 = pneg %p426
      $region66: #{tpu_custom_call.1} parent=5 // pred_check_branch
        %429 = sbr.rel (%p427) target = $region68
      $region67: #{tpu_custom_call.1} parent=5 // pred_region
        %s430 = ssub.s32 %s20, 2
        // Predicated region
        $region69: #{tpu_custom_call.1} parent=67 // pred_check
          %p431 = pneg %p180
        $region70: #{tpu_custom_call.1} parent=67 // pred_check_branch
          %433 = sbr.rel (%p431) target = $region72
        $region71: #{tpu_custom_call.1} parent=67 // pred_region
          %s434 = sand.u32 %s165, 1
          %s435 = scalar_lea.sflag [#allocation4], %s434
          %s436 = sand.u32 %s165, 1
          %s437 = smul.addr %s436, 8
          %s438 = scalar_lea.vmem [#allocation10], %s437
          %440 = dma.done %s435, 128
        $region72: #{tpu_custom_call.1} parent=67 // pred_fallthru
          _
      $region68: #{tpu_custom_call.1} parent=5 // pred_fallthru
        _
    $region6: #{tpu_custom_call.1} parent=1 // loop_footer
      %s24 = sadd.s32 1, %s20
    $region7: #{tpu_custom_call.1} parent=1 // loop_footer_branch
      %19 = sbr.rel target = $region3
    $region8: #{tpu_custom_call.1} parent=1 // loop_exit
      _
    %441 = vsyncpa [#allocation3], 1
    %s442 = scalar_lea.sflag [#allocation3], 1
    %443 = vsyncpa %s442, 1
    %444 = vsyncpa [#allocation8], 1
    %445 = vsyncpa [#allocation4], 1
    %s446 = scalar_lea.sflag [#allocation4], 1
    %447 = vsyncpa %s446, 1
    %448 = vsyncpa [#allocation5], 1
    %s449 = scalar_lea.sflag [#allocation5], 1
    %450 = vsyncpa %s449, 1

</llo_original>
